<compile_context>
chip_gen: v5e
topology: v5e:2x2
jax: 0.10.0
libtpu: 0.0.40
codegen_flags: <defaults>
</compile_context>

<pallas_src>
import functools

import jax
import jax.numpy as jnp
from jax import lax
from jax.experimental import pallas as pl
from jax.experimental.pallas import tpu as pltpu


def _bnn_partial_kernel(dist_ref, lab_ref,            # VMEM tiles (block_rows, 128)
                        lab_out, sq_out, sql_out,     # VMEM (1, 8, 128) per-core partial sums
                        *, block_rows, padded_rows, num_blocks, blocks_per_core):
    c = pl.program_id(0)   # core-split index ("parallel")
    i = pl.program_id(1)   # row-block index within this core's range ("arbitrary")

    @pl.when(i == 0)
    def _():
        lab_out[...] = jnp.zeros_like(lab_out)
        sq_out[...] = jnp.zeros_like(sq_out)
        sql_out[...] = jnp.zeros_like(sql_out)

    # Core 0 covers row blocks [0, bpc); core 1 covers [num_blocks - bpc,
    # num_blocks)  (always in-bounds, no fully-OOB DMA).  When num_blocks is
    # odd the two ranges overlap by exactly one block; core 1 skips that step.
    bidx = c * (num_blocks - blocks_per_core) + i      # global row-block index
    overlap = 2 * blocks_per_core - num_blocks         # 0 or 1, static

    def accumulate():
        d = dist_ref[...].astype(jnp.float32)          # (block_rows, 128)
        lab = lab_ref[...].astype(jnp.float32)
        t = d + lab - 1.0                              # == d - (1 - lab)
        sq = t * t                                     # loss_
        if num_blocks * block_rows != padded_rows:
            # Partial last block: rows >= padded_rows hold undefined VMEM data.
            row_ids = lax.broadcasted_iota(jnp.int32, (block_rows, 128), 0)
            keep = bidx * block_rows + row_ids < padded_rows
            sq = jnp.where(keep, sq, 0.0)
            lab = jnp.where(keep, lab, 0.0)
        sql = sq * lab
        # Sublane partial reduce: pure VPU adds, one (8,128) vreg per quantity.
        # (Contiguous sublane split; no cross-lane XLU work until the wrapper.)
        r8 = block_rows // 8
        lab_out[...] += lab.reshape(r8, 8, 128).sum(axis=0)[None]
        sq_out[...] += sq.reshape(r8, 8, 128).sum(axis=0)[None]
        sql_out[...] += sql.reshape(r8, 8, 128).sum(axis=0)[None]

    if overlap:
        @pl.when(jnp.logical_or(c == 0, i >= overlap))
        def _():
            accumulate()
    else:
        accumulate()


def _sublane_multiple(dtype):
    # Minimum sublane tile for the dtype: f32->8, bf16->16, int8/bool->32.
    return {1: 32, 2: 16, 4: 8, 8: 8}.get(jnp.dtype(dtype).itemsize, 8)


def bnn_loss(distance, labels, alpha, *, target_block_rows=4096):
    """distance: any shape with N elements (torch passes (N,1)); labels: N elements."""
    n = int(labels.size)
    d_flat = distance.reshape(-1)
    lab_flat = labels.reshape(-1)
    assert d_flat.size == n, "distance and labels must have the same element count"

    sub = max(_sublane_multiple(d_flat.dtype), _sublane_multiple(lab_flat.dtype))
    chunk = sub * 128

    # Minimal host padding: only up to the next (sub x 128) chunk so the flat
    # vector can be viewed as a lane-major (rows, 128) slab; skipped entirely
    # when already aligned.  Pad values (d = 1, lab = 0) contribute exactly
    # zero to all three sums, so no runtime mask is needed for them.
    rem = n % chunk
    if rem:
        pad = chunk - rem
        d_flat = jnp.pad(d_flat, (0, pad), constant_values=1)
        lab_flat = jnp.pad(lab_flat, (0, pad), constant_values=0)
    padded_rows = d_flat.size // 128

    d2 = d_flat.reshape(padded_rows, 128)
    lab2 = lab_flat.reshape(padded_rows, 128)

    # Tile size: large enough to amortize the ~0.35 us/grid-step overhead
    # (>= 1-2 MiB per input tile once N is large), clamped so small inputs run
    # as a single step; always a multiple of the dtype's sublane tile.
    block_rows = max(sub, (min(target_block_rows, padded_rows) // sub) * sub)
    num_blocks = -(-padded_rows // block_rows)
    blocks_per_core = -(-num_blocks // 2)

    # Scoped VMEM: 2 inputs x 2 pipeline buffers x tile plus headroom
    # (~8-9 MiB for the default f32 tile).  Capped below v7x's 64 MiB physical.
    tile_bytes = block_rows * 128 * (d2.dtype.itemsize + lab2.dtype.itemsize)
    vmem_limit = int(min(64 * 1024 * 1024, max(32 * 1024 * 1024, 4 * tile_bytes)))

    kernel = functools.partial(
        _bnn_partial_kernel,
        block_rows=block_rows, padded_rows=padded_rows,
        num_blocks=num_blocks, blocks_per_core=blocks_per_core)

    row_map = lambda c, i: (c * (num_blocks - blocks_per_core) + i, 0)
    out_map = lambda c, i: (c, 0, 0)

    out_shapes = tuple(jax.ShapeDtypeStruct((2, 8, 128), jnp.float32)
                       for _ in range(3))

    lab_part, sq_part, sql_part = pl.pallas_call(
        kernel,
        out_shape=out_shapes,
        grid=(2, blocks_per_core),
        in_specs=[pl.BlockSpec((block_rows, 128), row_map),
                  pl.BlockSpec((block_rows, 128), row_map)],
        out_specs=tuple(pl.BlockSpec((1, 8, 128), out_map) for _ in range(3)),
        compiler_params=pltpu.CompilerParams(
            dimension_semantics=("parallel", "arbitrary"),
            vmem_limit_bytes=vmem_limit),
    )(d2, lab2)

    # Epilogue in the wrapper: combine the two per-core partial slabs and do
    # the scalar math (a few hundred f32 adds -> negligible vs. streaming N).
    sum_lab = jnp.sum(lab_part)
    sum_sq = jnp.sum(sq_part)
    sum_sql = jnp.sum(sql_part)

    alpha = jnp.asarray(alpha, jnp.float32)
    # N as f32 matches the f32 PyTorch reference; exact up to N = 2^24.
    sum_lab_inv = jnp.float32(n) - sum_lab             # sum(1 - labels)
    pos = sum_sql / (sum_lab + 1e-05)
    neg = (sum_sq - sum_sql) / (sum_lab_inv + 1e-05)
    loss = (pos + alpha * neg) / (1.0 + alpha)
    return loss, pos, neg


def _reference(distance, labels, alpha):
    labels = labels.reshape(-1, 1).astype(jnp.float32)
    labels_ = labels * -1 + 1
    loss_ = (distance.reshape(-1, 1).astype(jnp.float32) - labels_) ** 2
    pos = jnp.sum(loss_ * labels) / (jnp.sum(labels) + 1e-05)
    neg = jnp.sum(loss_ * labels_) / (jnp.sum(labels_) + 1e-05)
    loss = (pos + alpha * neg) / (1 + alpha)
    return loss, pos, neg


if __name__ == "__main__":
    key = jax.random.PRNGKey(0)
    k1, k2, k3, k4 = jax.random.split(key, 4)
    ALPHA = 0.5

    # Case 1: small tail-padded input (N % 1024 != 0), single row block.
    N1 = 200
    dist_a = jax.random.uniform(k1, (N1, 1), dtype=jnp.float32)
    lab_a = jax.random.bernoulli(k2, p=0.3, shape=(N1,)).astype(jnp.float32)
    out_a = bnn_loss(dist_a, lab_a, ALPHA)
    jax.block_until_ready(out_a)
    ref_a = _reference(dist_a, lab_a, ALPHA)
    for got, want in zip(out_a, ref_a):
        assert jnp.allclose(got, want, rtol=1e-5, atol=1e-6), (got, want)

    # Case 2: multiple row blocks with an odd block count and a partial last
    # block (exercises the dual-core split ranges, overlap guard and OOB mask).
    N2 = 5000
    dist_b = jax.random.uniform(k3, (N2, 1), dtype=jnp.float32)
    lab_b = jax.random.bernoulli(k4, p=0.4, shape=(N2,)).astype(jnp.float32)
    out_b = bnn_loss(dist_b, lab_b, ALPHA, target_block_rows=16)
    jax.block_until_ready(out_b)
    ref_b = _reference(dist_b, lab_b, ALPHA)
    for got, want in zip(out_b, ref_b):
        assert jnp.allclose(got, want, rtol=1e-5, atol=1e-6), (got, want)

    print("KERNEL_OK")
</pallas_src>

<mosaic_0001>
module attributes {stable_mosaic.version = 11 : i64} {
  func.func @_bnn_partial_kernel(%arg0: i32, %arg1: i32, %arg2: memref<8x128xf32, #tpu.memory_space<vmem>>, %arg3: memref<8x128xf32, #tpu.memory_space<vmem>>, %arg4: memref<1x8x128xf32, #tpu.memory_space<vmem>>, %arg5: memref<1x8x128xf32, #tpu.memory_space<vmem>>, %arg6: memref<1x8x128xf32, #tpu.memory_space<vmem>>) attributes {dimension_semantics = [#tpu.dimension_semantics<parallel>, #tpu.dimension_semantics<arbitrary>], iteration_bounds = array<i64: 2, 1>, scalar_prefetch = 0 : i64, scratch_operands = 0 : i64, tpu.core_type = #tpu.core_type<tc>, window_params = [{transform_indices = @transform_0, window_bounds = array<i64: 8, 128>}, {transform_indices = @transform_1, window_bounds = array<i64: 8, 128>}, {transform_indices = @transform_2, window_bounds = array<i64: 1, 8, 128>}, {transform_indices = @transform_3, window_bounds = array<i64: 1, 8, 128>}, {transform_indices = @transform_4, window_bounds = array<i64: 1, 8, 128>}]} {
    %c0_i32 = arith.constant 0 : i32
    %0 = arith.cmpi eq, %arg1, %c0_i32 : i32
    %1 = arith.extui %0 : i1 to i32
    %c0_i32_0 = arith.constant 0 : i32
    %2 = arith.cmpi ne, %1, %c0_i32_0 : i32
    scf.if %2 {
      %cst = arith.constant 0.000000e+00 : f32
      %8 = vector.broadcast %cst : f32 to vector<1x8x128xf32>
      %c0 = arith.constant 0 : index
      %c0_3 = arith.constant 0 : index
      %c0_4 = arith.constant 0 : index
      %9 = vector.load %arg4[%c0, %c0_3, %c0_4] : memref<1x8x128xf32, #tpu.memory_space<vmem>>, vector<1x8x128xf32>
      tpu.vector_store %arg4[%c0, %c0_3, %c0_4], %8 {strides = array<i32>} : memref<1x8x128xf32, #tpu.memory_space<vmem>>, vector<1x8x128xf32>,
      %cst_5 = arith.constant 0.000000e+00 : f32
      %10 = vector.broadcast %cst_5 : f32 to vector<1x8x128xf32>
      %c0_6 = arith.constant 0 : index
      %c0_7 = arith.constant 0 : index
      %c0_8 = arith.constant 0 : index
      %11 = vector.load %arg5[%c0_6, %c0_7, %c0_8] : memref<1x8x128xf32, #tpu.memory_space<vmem>>, vector<1x8x128xf32>
      tpu.vector_store %arg5[%c0_6, %c0_7, %c0_8], %10 {strides = array<i32>} : memref<1x8x128xf32, #tpu.memory_space<vmem>>, vector<1x8x128xf32>,
      %cst_9 = arith.constant 0.000000e+00 : f32
      %12 = vector.broadcast %cst_9 : f32 to vector<1x8x128xf32>
      %c0_10 = arith.constant 0 : index
      %c0_11 = arith.constant 0 : index
      %c0_12 = arith.constant 0 : index
      %13 = vector.load %arg6[%c0_10, %c0_11, %c0_12] : memref<1x8x128xf32, #tpu.memory_space<vmem>>, vector<1x8x128xf32>
      tpu.vector_store %arg6[%c0_10, %c0_11, %c0_12], %12 {strides = array<i32>} : memref<1x8x128xf32, #tpu.memory_space<vmem>>, vector<1x8x128xf32>,
    } else {
    }
    %c0_i32_1 = arith.constant 0 : i32
    %3 = arith.cmpi eq, %arg0, %c0_i32_1 : i32
    %c1_i32 = arith.constant 1 : i32
    %4 = arith.cmpi sge, %arg1, %c1_i32 : i32
    %5 = arith.ori %3, %4 : i1
    %6 = arith.extui %5 : i1 to i32
    %c0_i32_2 = arith.constant 0 : i32
    %7 = arith.cmpi ne, %6, %c0_i32_2 : i32
    scf.if %7 {
      %c0 = arith.constant 0 : index
      %c0_3 = arith.constant 0 : index
      %8 = vector.load %arg2[%c0, %c0_3] : memref<8x128xf32, #tpu.memory_space<vmem>>, vector<8x128xf32>
      %c0_4 = arith.constant 0 : index
      %c0_5 = arith.constant 0 : index
      %9 = vector.load %arg3[%c0_4, %c0_5] : memref<8x128xf32, #tpu.memory_space<vmem>>, vector<8x128xf32>
      %10 = arith.addf %8, %9 : vector<8x128xf32>
      %cst = arith.constant 1.000000e+00 : f32
      %11 = vector.broadcast %cst : f32 to vector<8x128xf32>
      %12 = arith.subf %10, %11 : vector<8x128xf32>
      %13 = arith.mulf %12, %12 : vector<8x128xf32>
      %14 = arith.mulf %13, %9 : vector<8x128xf32>
      %c0_6 = arith.constant 0 : index
      %c0_7 = arith.constant 0 : index
      %c0_8 = arith.constant 0 : index
      %15 = vector.load %arg4[%c0_6, %c0_7, %c0_8] : memref<1x8x128xf32, #tpu.memory_space<vmem>>, vector<1x8x128xf32>
      %16 = vector.shape_cast %9 : vector<8x128xf32> to vector<1x8x128xf32>
      %cst_9 = arith.constant dense<0.000000e+00> : vector<8x128xf32>
      %17 = vector.multi_reduction <add>, %16, %cst_9 [0] : vector<1x8x128xf32> to vector<8x128xf32>
      %18 = vector.shape_cast %17 : vector<8x128xf32> to vector<1x8x128xf32>
      %19 = arith.addf %15, %18 : vector<1x8x128xf32>
      %c0_10 = arith.constant 0 : index
      %c0_11 = arith.constant 0 : index
      %c0_12 = arith.constant 0 : index
      %20 = vector.load %arg4[%c0_10, %c0_11, %c0_12] : memref<1x8x128xf32, #tpu.memory_space<vmem>>, vector<1x8x128xf32>
      tpu.vector_store %arg4[%c0_10, %c0_11, %c0_12], %19 {strides = array<i32>} : memref<1x8x128xf32, #tpu.memory_space<vmem>>, vector<1x8x128xf32>,
      %c0_13 = arith.constant 0 : index
      %c0_14 = arith.constant 0 : index
      %c0_15 = arith.constant 0 : index
      %21 = vector.load %arg5[%c0_13, %c0_14, %c0_15] : memref<1x8x128xf32, #tpu.memory_space<vmem>>, vector<1x8x128xf32>
      %22 = vector.shape_cast %13 : vector<8x128xf32> to vector<1x8x128xf32>
      %cst_16 = arith.constant dense<0.000000e+00> : vector<8x128xf32>
      %23 = vector.multi_reduction <add>, %22, %cst_16 [0] : vector<1x8x128xf32> to vector<8x128xf32>
      %24 = vector.shape_cast %23 : vector<8x128xf32> to vector<1x8x128xf32>
      %25 = arith.addf %21, %24 : vector<1x8x128xf32>
      %c0_17 = arith.constant 0 : index
      %c0_18 = arith.constant 0 : index
      %c0_19 = arith.constant 0 : index
      %26 = vector.load %arg5[%c0_17, %c0_18, %c0_19] : memref<1x8x128xf32, #tpu.memory_space<vmem>>, vector<1x8x128xf32>
      tpu.vector_store %arg5[%c0_17, %c0_18, %c0_19], %25 {strides = array<i32>} : memref<1x8x128xf32, #tpu.memory_space<vmem>>, vector<1x8x128xf32>,
      %c0_20 = arith.constant 0 : index
      %c0_21 = arith.constant 0 : index
      %c0_22 = arith.constant 0 : index
      %27 = vector.load %arg6[%c0_20, %c0_21, %c0_22] : memref<1x8x128xf32, #tpu.memory_space<vmem>>, vector<1x8x128xf32>
      %28 = vector.shape_cast %14 : vector<8x128xf32> to vector<1x8x128xf32>
      %cst_23 = arith.constant dense<0.000000e+00> : vector<8x128xf32>
      %29 = vector.multi_reduction <add>, %28, %cst_23 [0] : vector<1x8x128xf32> to vector<8x128xf32>
      %30 = vector.shape_cast %29 : vector<8x128xf32> to vector<1x8x128xf32>
      %31 = arith.addf %27, %30 : vector<1x8x128xf32>
      %c0_24 = arith.constant 0 : index
      %c0_25 = arith.constant 0 : index
      %c0_26 = arith.constant 0 : index
      %32 = vector.load %arg6[%c0_24, %c0_25, %c0_26] : memref<1x8x128xf32, #tpu.memory_space<vmem>>, vector<1x8x128xf32>
      tpu.vector_store %arg6[%c0_24, %c0_25, %c0_26], %31 {strides = array<i32>} : memref<1x8x128xf32, #tpu.memory_space<vmem>>, vector<1x8x128xf32>,
    } else {
    }
    return
  }
  func.func @transform_0(%arg0: i32, %arg1: i32) -> (i32, i32) {
    %c0_i32 = arith.constant 0 : i32
    %0 = arith.muli %arg0, %c0_i32 : i32
    %1 = arith.addi %0, %arg1 : i32
    %c0_i32_0 = arith.constant 0 : i32
    %c0_i32_1 = arith.constant 0 : i32
    return %1, %c0_i32_0 : i32, i32
  }
  func.func @transform_1(%arg0: i32, %arg1: i32) -> (i32, i32) {
    %c0_i32 = arith.constant 0 : i32
    %0 = arith.muli %arg0, %c0_i32 : i32
    %1 = arith.addi %0, %arg1 : i32
    %c0_i32_0 = arith.constant 0 : i32
    %c0_i32_1 = arith.constant 0 : i32
    return %1, %c0_i32_0 : i32, i32
  }
  func.func @transform_2(%arg0: i32, %arg1: i32) -> (i32, i32, i32) {
    %c0_i32 = arith.constant 0 : i32
    %c0_i32_0 = arith.constant 0 : i32
    %c0_i32_1 = arith.constant 0 : i32
    return %arg0, %c0_i32, %c0_i32_0 : i32, i32, i32
  }
  func.func @transform_3(%arg0: i32, %arg1: i32) -> (i32, i32, i32) {
    %c0_i32 = arith.constant 0 : i32
    %c0_i32_0 = arith.constant 0 : i32
    %c0_i32_1 = arith.constant 0 : i32
    return %arg0, %c0_i32, %c0_i32_0 : i32, i32, i32
  }
  func.func @transform_4(%arg0: i32, %arg1: i32) -> (i32, i32, i32) {
    %c0_i32 = arith.constant 0 : i32
    %c0_i32_0 = arith.constant 0 : i32
    %c0_i32_1 = arith.constant 0 : i32
    return %arg0, %c0_i32, %c0_i32_0 : i32, i32, i32
  }
}

</mosaic_0001>

<llo_original>
// kernel: tpu_custom_call.1
$region0: #{tpu_custom_call.1}
  #allocation0 [shape = 'u32[]', space=smem, size = 0x4, offset = 0x4, fixed_abs, tag = 'smem constant byte address 0x4 - core index']
  #allocation1 [shape = 'u32[72,128]{1,0:T(1,128)}', space=vmem, size = 0x9000, scoped, tag = 'internal scratch']
  %s0 = inlined_call_operand.hbm [shape: f32[8,128], index: 0, kind: input, shape index: {}]
  %s1 = inlined_call_operand.hbm [shape: f32[8,128], index: 1, kind: input, shape index: {}]
  %s2 = inlined_call_operand.hbm [shape: f32[2,8,128], index: 2, kind: output, shape index: {0}]
  %s3 = inlined_call_operand.hbm [shape: f32[2,8,128], index: 3, kind: output, shape index: {1}]
  %s4 = inlined_call_operand.hbm [shape: f32[2,8,128], index: 4, kind: output, shape index: {2}]
  %5 = xla_tuple %s2, %s3, %s4
  %s6 = sld [smem:[#allocation0]]
  $region73: #{tpu_custom_call.1} parent=0
    _
  %s8 = ssub.s32 1, %s6
  %s9 = scalar_select 0, %s8, %s6
  $region1: #{tpu_custom_call.1} parent=0
    #allocation2 [shape = 'u8[4096]{0}', space=vmem, size = 0x1000, scoped, tag = 'input window, operand 0, single buffered']
    #allocation3 [shape = 's32[2]{0}', space=sflag, size = 0x8, scoped, tag = 'scoped memory for tpu_custom_call.1']
    #allocation4 [shape = 's32[2]{0}', space=sflag, size = 0x8, scoped, tag = 'scoped memory for tpu_custom_call.1']
    #allocation5 [shape = 'u8[4096]{0}', space=vmem, size = 0x1000, scoped, tag = 'input window, operand 1, single buffered']
    #allocation6 [shape = 's32[1]{0}', space=sflag, size = 0x4, scoped, tag = 'scoped memory for tpu_custom_call.1']
    #allocation7 [shape = 'u8[8192]{0}', space=vmem, size = 0x2000, scoped, tag = 'output window, operand 0']
    #allocation8 [shape = 'u8[8192]{0}', space=vmem, size = 0x2000, scoped, tag = 'output window, operand 1']
    #allocation9 [shape = 's32[2]{0}', space=sflag, size = 0x8, scoped, tag = 'scoped memory for tpu_custom_call.1']
    #allocation10 [shape = 'u8[8192]{0}', space=vmem, size = 0x2000, scoped, tag = 'output window, operand 2']
    %10 = vsyncpa [#allocation3], 0
    %11 = vsyncpa [#allocation6], 0
    %12 = vsyncpa [#allocation4], 0
    %s13 = scalar_lea.sflag [#allocation4], 1
    %14 = vsyncpa %s13, 0
    %15 = vsyncpa [#allocation9], 0
    %s16 = scalar_lea.sflag [#allocation9], 1
    %17 = vsyncpa %s16, 0
    loop: start=0, step=1, limit=4
    $region2: #{tpu_custom_call.1} parent=1 // loop_pre_header
      _
    $region3: #{tpu_custom_call.1} parent=1 // loop_header
      %s19 = sphi 0, %s23
      %p20 = scmp.ge.s32.totalorder %s19, 4
      %s26 = sphi 0, %s38
      %s27 = sphi 0, %s34
      %s28 = sphi 0, %s26
      %s29 = sphi 0, %s27
      %s30 = sphi 0, %s28
      %s31 = sphi 0, %s29
      %s41 = sphi 0, %s43
      %s44 = sphi 0, %s41
      %s45 = sphi 0, %s44
      %s61 = sphi 0, %s45
      %s67 = sphi 0, %s69
      %s70 = sphi 0, %s67
      %s71 = sphi 0, %s70
      %s87 = sphi 0, %s71
      %s93 = sphi 0, %s95
      %s96 = sphi 0, %s93
      %s97 = sphi 0, %s96
      %s113 = sphi 0, %s97
      %s119 = sphi 0, %s121
      %s122 = sphi 0, %s119
      %s123 = sphi 0, %s122
      %s139 = sphi 0, %s123
      %s145 = sphi 0, %s147
      %s148 = sphi 0, %s145
      %s149 = sphi 0, %s148
      %s165 = sphi 0, %s149
    $region4: #{tpu_custom_call.1} parent=1 // loop_header_branch
      %22 = sbr.rel (%p20) target = $region8
    $region5: #{tpu_custom_call.1} parent=1 // loop_body
      %s24 = ssub.s32 %s19, 1
      %s25 = ssub.s32 %s19, 2
      %s32 = sadd.s32 1, %s27
      %p33 = scmp.ge.s32.totalorder %s32, 1
      %s34 = scalar_select %p33, 0, %s32
      %s35 = sadd.s32 1, %s26
      %s36 = scalar_select %p33, %s35, %s26
      %p37 = scmp.ge.s32.totalorder %s36, 2
      %s38 = scalar_select %p37, 0, %s36
      %s39 = ssub.s32 %s27, %s34
      %p40 = scmp.eq.s32.totalorder %s39, 0
      %s42 = sadd.s32 %s41, 1
      %s43 = scalar_select %p40, %s41, %s42
      %p46 = pneg %p40
      %p47 = scmp.eq.s32.totalorder %s19, 1
      %p48 = por %p46, %p47
      %p49 = scmp.ne.s32.totalorder %s41, %s44
      %p50 = scmp.eq.s32.totalorder %s19, 0
      %p51 = por %p49, %p50
      %p52 = scmp.ne.s32.totalorder %s41, %s44
      %p53 = scmp.eq.s32.totalorder %s24, 1
      %p54 = por %p52, %p53
      %p55 = scmp.ne.s32.totalorder %s44, %s45
      %p56 = scmp.eq.s32.totalorder %s24, 0
      %p57 = por %p55, %p56
      %p58 = scmp.ne.s32.totalorder %s44, %s45
      %p59 = scmp.eq.s32.totalorder %s25, 1
      %p60 = por %p58, %p59
      %p62 = scmp.ne.s32.totalorder %s45, %s61
      %p63 = scmp.eq.s32.totalorder %s25, 0
      %p64 = por %p62, %p63
      %s65 = ssub.s32 %s27, %s34
      %p66 = scmp.eq.s32.totalorder %s65, 0
      %s68 = sadd.s32 %s67, 1
      %s69 = scalar_select %p66, %s67, %s68
      %p72 = pneg %p66
      %p73 = scmp.eq.s32.totalorder %s19, 1
      %p74 = por %p72, %p73
      %p75 = scmp.ne.s32.totalorder %s67, %s70
      %p76 = scmp.eq.s32.totalorder %s19, 0
      %p77 = por %p75, %p76
      %p78 = scmp.ne.s32.totalorder %s67, %s70
      %p79 = scmp.eq.s32.totalorder %s24, 1
      %p80 = por %p78, %p79
      %p81 = scmp.ne.s32.totalorder %s70, %s71
      %p82 = scmp.eq.s32.totalorder %s24, 0
      %p83 = por %p81, %p82
      %p84 = scmp.ne.s32.totalorder %s70, %s71
      %p85 = scmp.eq.s32.totalorder %s25, 1
      %p86 = por %p84, %p85
      %p88 = scmp.ne.s32.totalorder %s71, %s87
      %p89 = scmp.eq.s32.totalorder %s25, 0
      %p90 = por %p88, %p89
      %s91 = ssub.s32 %s26, %s38
      %p92 = scmp.eq.s32.totalorder %s91, 0
      %s94 = sadd.s32 %s93, 1
      %s95 = scalar_select %p92, %s93, %s94
      %p98 = pneg %p92
      %p99 = scmp.eq.s32.totalorder %s19, 1
      %p100 = por %p98, %p99
      %p101 = scmp.ne.s32.totalorder %s93, %s96
      %p102 = scmp.eq.s32.totalorder %s19, 0
      %p103 = por %p101, %p102
      %p104 = scmp.ne.s32.totalorder %s93, %s96
      %p105 = scmp.eq.s32.totalorder %s24, 1
      %p106 = por %p104, %p105
      %p107 = scmp.ne.s32.totalorder %s96, %s97
      %p108 = scmp.eq.s32.totalorder %s24, 0
      %p109 = por %p107, %p108
      %p110 = scmp.ne.s32.totalorder %s96, %s97
      %p111 = scmp.eq.s32.totalorder %s25, 1
      %p112 = por %p110, %p111
      %p114 = scmp.ne.s32.totalorder %s97, %s113
      %p115 = scmp.eq.s32.totalorder %s25, 0
      %p116 = por %p114, %p115
      %s117 = ssub.s32 %s26, %s38
      %p118 = scmp.eq.s32.totalorder %s117, 0
      %s120 = sadd.s32 %s119, 1
      %s121 = scalar_select %p118, %s119, %s120
      %p124 = pneg %p118
      %p125 = scmp.eq.s32.totalorder %s19, 1
      %p126 = por %p124, %p125
      %p127 = scmp.ne.s32.totalorder %s119, %s122
      %p128 = scmp.eq.s32.totalorder %s19, 0
      %p129 = por %p127, %p128
      %p130 = scmp.ne.s32.totalorder %s119, %s122
      %p131 = scmp.eq.s32.totalorder %s24, 1
      %p132 = por %p130, %p131
      %p133 = scmp.ne.s32.totalorder %s122, %s123
      %p134 = scmp.eq.s32.totalorder %s24, 0
      %p135 = por %p133, %p134
      %p136 = scmp.ne.s32.totalorder %s122, %s123
      %p137 = scmp.eq.s32.totalorder %s25, 1
      %p138 = por %p136, %p137
      %p140 = scmp.ne.s32.totalorder %s123, %s139
      %p141 = scmp.eq.s32.totalorder %s25, 0
      %p142 = por %p140, %p141
      %s143 = ssub.s32 %s26, %s38
      %p144 = scmp.eq.s32.totalorder %s143, 0
      %s146 = sadd.s32 %s145, 1
      %s147 = scalar_select %p144, %s145, %s146
      %p150 = pneg %p144
      %p151 = scmp.eq.s32.totalorder %s19, 1
      %p152 = por %p150, %p151
      %p153 = scmp.ne.s32.totalorder %s145, %s148
      %p154 = scmp.eq.s32.totalorder %s19, 0
      %p155 = por %p153, %p154
      %p156 = scmp.ne.s32.totalorder %s145, %s148
      %p157 = scmp.eq.s32.totalorder %s24, 1
      %p158 = por %p156, %p157
      %p159 = scmp.ne.s32.totalorder %s148, %s149
      %p160 = scmp.eq.s32.totalorder %s24, 0
      %p161 = por %p159, %p160
      %p162 = scmp.ne.s32.totalorder %s148, %s149
      %p163 = scmp.eq.s32.totalorder %s25, 1
      %p164 = por %p162, %p163
      %p166 = scmp.ne.s32.totalorder %s149, %s165
      %p167 = scmp.eq.s32.totalorder %s25, 0
      %p168 = por %p166, %p167
      %p169 = scmp.le.s32.totalorder 1, %s19
      %p170 = scmp.lt.s32.totalorder %s19, 3
      %p171 = pnand %p169, %p170
      %p172 = pneg %p171
      // Predicated region
      $region9: #{tpu_custom_call.1} parent=5 // pred_check
        _
      $region10: #{tpu_custom_call.1} parent=5 // pred_check_branch
        %174 = sbr.rel (%p171) target = $region12
      $region11: #{tpu_custom_call.1} parent=5 // pred_region
        %s175 = ssub.s32 %s19, 1
        // Predicated region
        $region13: #{tpu_custom_call.1} parent=11 // pred_check
          %p176 = pneg %p57
        $region14: #{tpu_custom_call.1} parent=11 // pred_check_branch
          %178 = sbr.rel (%p176) target = $region16
        $region15: #{tpu_custom_call.1} parent=11 // pred_region
          %180 = vsyncadd [#allocation3], 0
          %s181 = smul.addr %s29, 8
          %s182 = scalar_lea.hbm %s0, %s181
          %s184 = sshll.u32 %s182, 4
          %s185 = int_to_ptr.hbm [resolvable:$true] %s184
          %s186 = sshll.u32 [#allocation2], 4
          %s187 = int_to_ptr.vmem [resolvable:$true] %s186
          %189 = dma.hbm_to_vmem [thread:$0]  %s185, 128, %s187, [#allocation3]
        $region16: #{tpu_custom_call.1} parent=11 // pred_fallthru
          _
        // Predicated region
        $region17: #{tpu_custom_call.1} parent=11 // pred_check
          %p190 = pneg %p83
        $region18: #{tpu_custom_call.1} parent=11 // pred_check_branch
          %192 = sbr.rel (%p190) target = $region20
        $region19: #{tpu_custom_call.1} parent=11 // pred_region
          %194 = vsyncadd [#allocation6], 0
          %s195 = smul.addr %s29, 8
          %s196 = scalar_lea.hbm %s1, %s195
          %s198 = sshll.u32 %s196, 4
          %s199 = int_to_ptr.hbm [resolvable:$true] %s198
          %s200 = sshll.u32 [#allocation5], 4
          %s201 = int_to_ptr.vmem [resolvable:$true] %s200
          %203 = dma.hbm_to_vmem [thread:$0]  %s199, 128, %s201, [#allocation6]
        $region20: #{tpu_custom_call.1} parent=11 // pred_fallthru
          _
      $region12: #{tpu_custom_call.1} parent=5 // pred_fallthru
        _
      %p204 = scmp.lt.s32.totalorder %s19, 2
      // Predicated region
      $region21: #{tpu_custom_call.1} parent=5 // pred_check
        %p205 = pneg %p204
      $region22: #{tpu_custom_call.1} parent=5 // pred_check_branch
        %207 = sbr.rel (%p205) target = $region24
      $region23: #{tpu_custom_call.1} parent=5 // pred_region
        _
      $region24: #{tpu_custom_call.1} parent=5 // pred_fallthru
        _
      %p208 = scmp.le.s32.totalorder 1, %s19
      %p209 = scmp.lt.s32.totalorder %s19, 3
      %p210 = pnand %p208, %p209
      %p211 = pneg %p210
      // Predicated region
      $region25: #{tpu_custom_call.1} parent=5 // pred_check
        _
      $region26: #{tpu_custom_call.1} parent=5 // pred_check_branch
        %213 = sbr.rel (%p210) target = $region28
      $region27: #{tpu_custom_call.1} parent=5 // pred_region
        %s214 = ssub.s32 %s19, 1
        // Predicated region
        $region29: #{tpu_custom_call.1} parent=27 // pred_check
          %p215 = pneg %p57
        $region30: #{tpu_custom_call.1} parent=27 // pred_check_branch
          %217 = sbr.rel (%p215) target = $region32
        $region31: #{tpu_custom_call.1} parent=27 // pred_region
          %219 = dma.done [#allocation3], 128
        $region32: #{tpu_custom_call.1} parent=27 // pred_fallthru
          _
        // Predicated region
        $region33: #{tpu_custom_call.1} parent=27 // pred_check
          %p220 = pneg %p83
        $region34: #{tpu_custom_call.1} parent=27 // pred_check_branch
          %222 = sbr.rel (%p220) target = $region36
        $region35: #{tpu_custom_call.1} parent=27 // pred_region
          %224 = dma.done [#allocation6], 128
        $region36: #{tpu_custom_call.1} parent=27 // pred_fallthru
          _
        %p225 = pneg %p57
        %p226 = pneg %p54
        %p227 = pneg %p83
        %p228 = pneg %p80
        %p229 = pneg %p109
        %p230 = pneg %p106
        %s231 = sand.u32 %s96, 1
        %s232 = scalar_lea.sflag [#allocation4], %s231
        %s233 = sand.u32 %s96, 1
        %s234 = smul.addr %s233, 8
        %s235 = scalar_lea.vmem [#allocation7], %s234
        %p236 = pneg %p135
        %p237 = pneg %p132
        %s238 = sand.u32 %s24, 1
        %s239 = scalar_lea.sflag [#allocation9], %s238
        %s240 = sand.u32 %s122, 1
        %s241 = smul.addr %s240, 8
        %s242 = scalar_lea.vmem [#allocation8], %s241
        %p243 = pneg %p161
        %p244 = pneg %p158
        %s245 = sand.u32 %s24, 1
        %s246 = scalar_lea.sflag [#allocation9], %s245
        %s247 = sand.u32 %s148, 1
        %s248 = smul.addr %s247, 8
        %s249 = scalar_lea.vmem [#allocation10], %s248
        %p250 = scmp.eq.s32.totalorder %s29, 0
        // Predicated region
        $region37: #{tpu_custom_call.1} parent=27 // pred_check
          %p251 = pneg %p250
        $region38: #{tpu_custom_call.1} parent=27 // pred_check_branch
          %253 = sbr.rel (%p251) target = $region40
        $region39: #{tpu_custom_call.1} parent=27 // pred_region
          %254 = vst [vmem:[%s235] sm:$0xff] 0.0
          %255 = vst [vmem:[%s242] sm:$0xff] 0.0
          %256 = vst [vmem:[%s249] sm:$0xff] 0.0
        $region40: #{tpu_custom_call.1} parent=27 // pred_fallthru
          _
        %p257 = scmp.eq.s32.totalorder %s28, 0
        %p258 = scmp.ge.s32.totalorder %s29, 1
        %p259 = por %p257, %p258
        // Predicated region
        $region41: #{tpu_custom_call.1} parent=27 // pred_check
          %p260 = pneg %p259
        $region42: #{tpu_custom_call.1} parent=27 // pred_check_branch
          %262 = sbr.rel (%p260) target = $region44
        $region43: #{tpu_custom_call.1} parent=27 // pred_region
          %v263 = vld [vmem:[#allocation2] sm:$0xff]
          %v264 = vld [vmem:[#allocation5] sm:$0xff]
          %v265 = vadd.f32 %v263, %v264
          %v266 = vsub.f32 %v265, 1.0
          %v267 = vmul.f32 %v266, %v266
          %v268 = vmul.f32 %v267, %v264
          %v269 = vld [vmem:[%s235] sm:$0xff]
          %v270 = vadd.f32 %v264, 0.0
          %v271 = vadd.f32 %v269, %v270
          %272 = vst [vmem:[%s235] sm:$0xff] %v271
          %v273 = vld [vmem:[%s242] sm:$0xff]
          %v274 = vadd.f32 %v267, 0.0
          %v275 = vadd.f32 %v273, %v274
          %276 = vst [vmem:[%s242] sm:$0xff] %v275
          %v277 = vld [vmem:[%s249] sm:$0xff]
          %v278 = vadd.f32 %v268, 0.0
          %v279 = vadd.f32 %v277, %v278
          %280 = vst [vmem:[%s249] sm:$0xff] %v279
        $region44: #{tpu_custom_call.1} parent=27 // pred_fallthru
          _
        %s281 = sand.u32 %s96, 1
        %s282 = scalar_lea.sflag [#allocation4], %s281
        %s283 = sand.u32 %s96, 1
        %s284 = smul.addr %s283, 8
        %s285 = scalar_lea.vmem [#allocation7], %s284
        %s286 = sand.u32 %s24, 1
        %s287 = scalar_lea.sflag [#allocation9], %s286
        %s288 = sand.u32 %s122, 1
        %s289 = smul.addr %s288, 8
        %s290 = scalar_lea.vmem [#allocation8], %s289
        %s291 = sand.u32 %s24, 1
        %s292 = scalar_lea.sflag [#allocation9], %s291
        %s293 = sand.u32 %s148, 1
        %s294 = smul.addr %s293, 8
        %s295 = scalar_lea.vmem [#allocation10], %s294
        // Predicated region
        $region45: #{tpu_custom_call.1} parent=27 // pred_check
          %p296 = pneg %p106
        $region46: #{tpu_custom_call.1} parent=27 // pred_check_branch
          %298 = sbr.rel (%p296) target = $region48
        $region47: #{tpu_custom_call.1} parent=27 // pred_region
          %300 = vsyncadd %s282, 0
          %s301 = smul.addr %s28, 8
          %s302 = scalar_lea.hbm %s2, %s301
          %s304 = sshll.u32 %s285, 4
          %s305 = int_to_ptr.vmem [resolvable:$true] %s304
          %s306 = sshll.u32 %s302, 4
          %s307 = int_to_ptr.hbm [resolvable:$true] %s306
          %309 = dma.vmem_to_hbm [thread:$0]  %s305, 128, %s307, %s282
        $region48: #{tpu_custom_call.1} parent=27 // pred_fallthru
          _
        // Predicated region
        $region49: #{tpu_custom_call.1} parent=27 // pred_check
          %p310 = pneg %p132
        $region50: #{tpu_custom_call.1} parent=27 // pred_check_branch
          %312 = sbr.rel (%p310) target = $region52
        $region51: #{tpu_custom_call.1} parent=27 // pred_region
          %314 = vsyncadd %s287, 0
          %s315 = smul.addr %s28, 8
          %s316 = scalar_lea.hbm %s3, %s315
          %s318 = sshll.u32 %s290, 4
          %s319 = int_to_ptr.vmem [resolvable:$true] %s318
          %s320 = sshll.u32 %s316, 4
          %s321 = int_to_ptr.hbm [resolvable:$true] %s320
          %323 = dma.vmem_to_hbm [thread:$0]  %s319, 128, %s321, %s287
        $region52: #{tpu_custom_call.1} parent=27 // pred_fallthru
          _
        // Predicated region
        $region53: #{tpu_custom_call.1} parent=27 // pred_check
          %p324 = pneg %p158
        $region54: #{tpu_custom_call.1} parent=27 // pred_check_branch
          %326 = sbr.rel (%p324) target = $region56
        $region55: #{tpu_custom_call.1} parent=27 // pred_region
          %328 = vsyncadd %s292, 0
          %s329 = smul.addr %s28, 8
          %s330 = scalar_lea.hbm %s4, %s329
          %s332 = sshll.u32 %s295, 4
          %s333 = int_to_ptr.vmem [resolvable:$true] %s332
          %s334 = sshll.u32 %s330, 4
          %s335 = int_to_ptr.hbm [resolvable:$true] %s334
          %337 = dma.vmem_to_hbm [thread:$0]  %s333, 128, %s335, %s292
        $region56: #{tpu_custom_call.1} parent=27 // pred_fallthru
          _
      $region28: #{tpu_custom_call.1} parent=5 // pred_fallthru
        _
      %p338 = scmp.le.s32.totalorder 2, %s19
      // Predicated region
      $region57: #{tpu_custom_call.1} parent=5 // pred_check
        %p339 = pneg %p338
      $region58: #{tpu_custom_call.1} parent=5 // pred_check_branch
        %341 = sbr.rel (%p339) target = $region60
      $region59: #{tpu_custom_call.1} parent=5 // pred_region
        %s342 = ssub.s32 %s19, 2
        // Predicated region
        $region61: #{tpu_custom_call.1} parent=59 // pred_check
          %p343 = pneg %p112
        $region62: #{tpu_custom_call.1} parent=59 // pred_check_branch
          %345 = sbr.rel (%p343) target = $region64
        $region63: #{tpu_custom_call.1} parent=59 // pred_region
          %s346 = sand.u32 %s97, 1
          %s347 = scalar_lea.sflag [#allocation4], %s346
          %s348 = sand.u32 %s97, 1
          %s349 = smul.addr %s348, 8
          %s350 = scalar_lea.vmem [#allocation7], %s349
          %352 = dma.done %s347, 128
        $region64: #{tpu_custom_call.1} parent=59 // pred_fallthru
          _
        // Predicated region
        $region65: #{tpu_custom_call.1} parent=59 // pred_check
          %p353 = pneg %p138
        $region66: #{tpu_custom_call.1} parent=59 // pred_check_branch
          %355 = sbr.rel (%p353) target = $region68
        $region67: #{tpu_custom_call.1} parent=59 // pred_region
          %s356 = sand.u32 %s25, 1
          %s357 = scalar_lea.sflag [#allocation9], %s356
          %s358 = sand.u32 %s123, 1
          %s359 = smul.addr %s358, 8
          %s360 = scalar_lea.vmem [#allocation8], %s359
          %362 = dma.done %s357, 128
        $region68: #{tpu_custom_call.1} parent=59 // pred_fallthru
          _
        // Predicated region
        $region69: #{tpu_custom_call.1} parent=59 // pred_check
          %p363 = pneg %p164
        $region70: #{tpu_custom_call.1} parent=59 // pred_check_branch
          %365 = sbr.rel (%p363) target = $region72
        $region71: #{tpu_custom_call.1} parent=59 // pred_region
          %s366 = sand.u32 %s25, 1
          %s367 = scalar_lea.sflag [#allocation9], %s366
          %s368 = sand.u32 %s149, 1
          %s369 = smul.addr %s368, 8
          %s370 = scalar_lea.vmem [#allocation10], %s369
          %372 = dma.done %s367, 128
        $region72: #{tpu_custom_call.1} parent=59 // pred_fallthru
          _
      $region60: #{tpu_custom_call.1} parent=5 // pred_fallthru
        _
    $region6: #{tpu_custom_call.1} parent=1 // loop_footer
      %s23 = sadd.s32 1, %s19
    $region7: #{tpu_custom_call.1} parent=1 // loop_footer_branch
      %18 = sbr.rel target = $region3
    $region8: #{tpu_custom_call.1} parent=1 // loop_exit
      _
    %373 = vsyncpa [#allocation3], 1
    %s374 = scalar_lea.sflag [#allocation3], 1
    %375 = vsyncpa %s374, 1
    %376 = vsyncpa [#allocation6], 1
    %377 = vsyncpa [#allocation4], 1
    %s378 = scalar_lea.sflag [#allocation4], 1
    %379 = vsyncpa %s378, 1
    %380 = vsyncpa [#allocation9], 1
    %s381 = scalar_lea.sflag [#allocation9], 1
    %382 = vsyncpa %s381, 1

</llo_original>
